<compile_context>
chip_gen: v5e
topology: v5e:2x2
jax: 0.10.0
libtpu: 0.0.40
codegen_flags: <defaults>
</compile_context>

<pallas_src>
import functools
import math

import jax
import jax.numpy as jnp
import numpy as np
from jax import lax
from jax.experimental import pallas as pl
from jax.experimental.pallas import tpu as pltpu


def _round_up(x: int, m: int) -> int:
    return ((x + m - 1) // m) * m


# ----------------------------------------------------------------------------
# Pallas kernel: one chunk of T_BLOCK time steps per grid iteration.
#   preact_ref : (T_BLOCK, 4H)  precomputed x@wx + b rows for this chunk
#   h0_ref     : (1, H)         initial hidden state
#   c0_ref     : (1, H)         initial cell state
#   wh_ref     : (H, 4H)        stacked [w_hi, w_hf, w_hg, w_ho]^T (resident)
# outputs:
#   seq_ref    : (T_BLOCK, H)   hidden states of this chunk (one DMA / chunk)
#   hc_ref     : (2, H)         final (h, c), written on the last chunk
# scratch:
#   h_sc, c_sc : (1, H) f32     recurrent state, persists across chunks
# static (closed over):
#   t_block, t_total, unroll
# ----------------------------------------------------------------------------
def lstm_chunk_kernel(preact_ref, h0_ref, c0_ref, wh_ref,
                      seq_ref, hc_ref, h_sc, c_sc,
                      *, t_block: int, t_total: int, unroll: int):
    chunk = pl.program_id(0)

    @pl.when(chunk == 0)
    def _():
        h_sc[...] = h0_ref[...]
        c_sc[...] = c0_ref[...]

    wh = wh_ref[...]                      # (H, 4H), loaded once per chunk
    H = wh.shape[0]
    base = chunk * t_block                # global step offset of this chunk
    need_mask = (t_total % t_block) != 0  # static: ragged tail handling

    def body(t, carry):
        h, c = carry
        pre = preact_ref[pl.ds(t, 1), :]                       # (1, 4H)
        # Only h @ wh is left on the serial chain (x@wx + b precomputed).
        gates = pre + jnp.dot(h, wh, preferred_element_type=jnp.float32)

        # 4H = 128 lanes -> one EUP push per transcendental, then lane slices.
        sig = jax.nn.sigmoid(gates)
        tan = jnp.tanh(gates)
        i = sig[:, 0 * H:1 * H]
        f = sig[:, 1 * H:2 * H]
        g = tan[:, 2 * H:3 * H]
        o = sig[:, 3 * H:4 * H]

        c_next = f * c + i * g
        h_next = o * jnp.tanh(c_next)

        if need_mask:
            valid = (base + t) < t_total
            h_next = jnp.where(valid, h_next, h)
            c_next = jnp.where(valid, c_next, c)

        seq_ref[pl.ds(t, 1), :] = h_next.astype(seq_ref.dtype)
        return (h_next, c_next)

    h_fin, c_fin = lax.fori_loop(0, t_block, body,
                                 (h_sc[...], c_sc[...]), unroll=unroll)
    h_sc[...] = h_fin
    c_sc[...] = c_fin

    @pl.when(chunk == pl.num_programs(0) - 1)
    def _():
        hc_ref[0:1, :] = h_fin.astype(hc_ref.dtype)
        hc_ref[1:2, :] = c_fin.astype(hc_ref.dtype)


@jax.jit
def lstm_forward_pallas(x_steps, h0_row, c0_row, wx, wh, b):
    """x_steps: (T, I); h0_row/c0_row: (1, H); wx: (I, 4H); wh: (H, 4H);
    b: (1, 4H).  Returns (hidden_seq (T, H), hc (2, H))."""
    T, _I = x_steps.shape
    H = h0_row.shape[-1]

    # Hoist the input projection out of the recurrence: one lane-dense matmul,
    # bias folded in.  (T, I) @ (I, 4H) -> (T, 4H).
    preact = jnp.dot(x_steps, wx, preferred_element_type=jnp.float32) + b

    # Chunk the time axis.  T_BLOCK rows per grid step, padded to a multiple.
    t_block = min(128, _round_up(T, 8))
    t_pad = _round_up(T, t_block)
    if t_pad != T:
        preact = jnp.pad(preact, ((0, t_pad - T), (0, 0)))
    n_chunks = t_pad // t_block
    unroll = min(8, t_block)

    kernel = functools.partial(lstm_chunk_kernel,
                               t_block=t_block, t_total=T, unroll=unroll)

    grid_spec = pltpu.PrefetchScalarGridSpec(
        num_scalar_prefetch=0,
        grid=(n_chunks,),
        in_specs=[
            pl.BlockSpec((t_block, 4 * H), lambda i: (i, 0)),  # preact chunk
            pl.BlockSpec((1, H), lambda i: (0, 0)),            # h0 (resident)
            pl.BlockSpec((1, H), lambda i: (0, 0)),            # c0 (resident)
            pl.BlockSpec((H, 4 * H), lambda i: (0, 0)),        # wh (resident)
        ],
        out_specs=(
            pl.BlockSpec((t_block, H), lambda i: (i, 0)),      # hidden chunk
            pl.BlockSpec((2, H), lambda i: (0, 0)),            # final (h, c)
        ),
        scratch_shapes=[pltpu.VMEM((1, H), jnp.float32),
                        pltpu.VMEM((1, H), jnp.float32)],
    )

    seq_pad, hc = pl.pallas_call(
        kernel,
        out_shape=(jax.ShapeDtypeStruct((t_pad, H), jnp.float32),
                   jax.ShapeDtypeStruct((2, H), jnp.float32)),
        grid_spec=grid_spec,
        compiler_params=pltpu.CompilerParams(
            dimension_semantics=("arbitrary",)),   # serial recurrence
    )(preact, h0_row, c0_row, wh)

    return seq_pad[:T], hc


# ----------------------------------------------------------------------------
# Module-equivalent wrapper
# ----------------------------------------------------------------------------
class LSTMPallas:
    def __init__(self, input_size: int, hidden_size: int, key):
        self.input_size = input_size
        self.hidden_size = hidden_size
        stdv = 1.0 / math.sqrt(hidden_size)
        names = ["w_ii", "w_hi", "b_ii", "b_hi",
                 "w_if", "w_hf", "b_if", "b_hf",
                 "w_io", "w_ho", "b_io", "b_ho",
                 "w_ig", "w_hg", "b_ig", "b_hg"]
        shapes = {
            "w_ii": (hidden_size, input_size), "w_hi": (hidden_size, hidden_size),
            "b_ii": (hidden_size, 1), "b_hi": (hidden_size, 1),
            "w_if": (hidden_size, input_size), "w_hf": (hidden_size, hidden_size),
            "b_if": (hidden_size, 1), "b_hf": (hidden_size, 1),
            "w_io": (hidden_size, input_size), "w_ho": (hidden_size, hidden_size),
            "b_io": (hidden_size, 1), "b_ho": (hidden_size, 1),
            "w_ig": (hidden_size, input_size), "w_hg": (hidden_size, hidden_size),
            "b_ig": (hidden_size, 1), "b_hg": (hidden_size, 1),
        }
        keys = jax.random.split(key, len(names))
        self.p = {n: jax.random.uniform(k, shapes[n], jnp.float32, -stdv, stdv)
                  for n, k in zip(names, keys)}

        p = self.p
        # Fused, lane-dense parameter layout (gate order i, f, g, o):
        #   wx : (input_size, 4H)    wh : (hidden_size, 4H)    b : (1, 4H)
        # Biases pre-summed (b_i* + b_h*) once at init.
        self.wx = jnp.concatenate(
            [p["w_ii"].T, p["w_if"].T, p["w_ig"].T, p["w_io"].T], axis=1)
        self.wh = jnp.concatenate(
            [p["w_hi"].T, p["w_hf"].T, p["w_hg"].T, p["w_ho"].T], axis=1)
        self.b = jnp.concatenate(
            [(p["b_ii"] + p["b_hi"]).T, (p["b_if"] + p["b_hf"]).T,
             (p["b_ig"] + p["b_hg"]).T, (p["b_io"] + p["b_ho"]).T], axis=1)

    def __call__(self, inputs, state):
        """inputs: [1, T, input_size]; state: ([1,1,H], [1,1,H]) or None."""
        H = self.hidden_size
        _, T, I = inputs.shape
        if state is None:
            h_row = jnp.zeros((1, H), jnp.float32)
            c_row = jnp.zeros((1, H), jnp.float32)
        else:
            h, c = state
            h_row = h.reshape(1, H)
            c_row = c.reshape(1, H)

        x_steps = inputs.reshape(T, I)   # batch = 1: one row per time step

        seq, hc = lstm_forward_pallas(
            x_steps, h_row, c_row, self.wx, self.wh, self.b)

        hidden_seq = seq.reshape(T, 1, H)      # torch.cat(dim=0) layout
        h_next_t = hc[0].reshape(1, 1, H)
        c_next_t = hc[1].reshape(1, 1, H)
        return hidden_seq, (h_next_t, c_next_t)

    # Host-side numpy reference mirroring the PyTorch column-vector math.
    def reference(self, inputs, state):
        p = {k: np.asarray(v, np.float32) for k, v in self.p.items()}
        H = self.hidden_size
        _, T, I = inputs.shape
        if state is None:
            h = np.zeros((H, 1), np.float32)
            c = np.zeros((H, 1), np.float32)
        else:
            hh, cc = state
            h = np.asarray(hh, np.float32).reshape(1, H).T
            c = np.asarray(cc, np.float32).reshape(1, H).T

        def sig(z):
            return 1.0 / (1.0 + np.exp(-z))

        x_np = np.asarray(inputs, np.float32)
        seq = []
        for t in range(T):
            x = x_np[:, t, :].T
            i = sig(p["w_ii"] @ x + p["b_ii"] + p["w_hi"] @ h + p["b_hi"])
            f = sig(p["w_if"] @ x + p["b_if"] + p["w_hf"] @ h + p["b_hf"])
            g = np.tanh(p["w_ig"] @ x + p["b_ig"] + p["w_hg"] @ h + p["b_hg"])
            o = sig(p["w_io"] @ x + p["b_io"] + p["w_ho"] @ h + p["b_ho"])
            c = f * c + i * g
            h = o * np.tanh(c)
            seq.append(h.T[None])
        hidden_seq = np.concatenate(seq, axis=0)
        return hidden_seq, (h.T[None], c.T[None])


if __name__ == "__main__":
    input_size = 10
    hidden_size = 32   # 4H = 128 lanes: one vreg / one MXU column block

    key = jax.random.PRNGKey(0)
    k_param, k_x, k_h, k_c, k_long = jax.random.split(key, 5)

    model = LSTMPallas(input_size, hidden_size, k_param)

    # ---- module-spec shapes: inputs [1, 1, 10], state [1, 1, 32] ----------
    inputs = jax.random.normal(k_x, (1, 1, input_size), jnp.float32)
    h0 = jax.random.normal(k_h, (1, 1, hidden_size), jnp.float32)
    c0 = jax.random.normal(k_c, (1, 1, hidden_size), jnp.float32)

    hidden_seq, (h_next, c_next) = model(inputs, (h0, c0))
    jax.block_until_ready((hidden_seq, h_next, c_next))

    ref_seq, (ref_h, ref_c) = model.reference(inputs, (h0, c0))
    assert hidden_seq.shape == (1, 1, hidden_size)
    assert h_next.shape == (1, 1, hidden_size)
    assert c_next.shape == (1, 1, hidden_size)
    np.testing.assert_allclose(np.asarray(hidden_seq), ref_seq,
                               rtol=2e-5, atol=2e-5)
    np.testing.assert_allclose(np.asarray(h_next), ref_h, rtol=2e-5, atol=2e-5)
    np.testing.assert_allclose(np.asarray(c_next), ref_c, rtol=2e-5, atol=2e-5)

    # ---- None-state path (PyTorch's zero-init branch) ---------------------
    seq2, (h2, c2) = model(inputs, None)
    jax.block_until_ready((seq2, h2, c2))
    ref_seq2, (ref_h2, ref_c2) = model.reference(inputs, None)
    np.testing.assert_allclose(np.asarray(seq2), ref_seq2, rtol=2e-5, atol=2e-5)
    np.testing.assert_allclose(np.asarray(h2), ref_h2, rtol=2e-5, atol=2e-5)
    np.testing.assert_allclose(np.asarray(c2), ref_c2, rtol=2e-5, atol=2e-5)

    # ---- longer sequence: exercises multi-chunk grid + ragged-tail mask ---
    T_long = 150   # T_BLOCK = 128 -> 2 chunks, 106 padded steps masked
    inputs_long = jax.random.normal(k_long, (1, T_long, input_size), jnp.float32)
    seq3, (h3, c3) = model(inputs_long, (h0, c0))
    jax.block_until_ready((seq3, h3, c3))
    ref_seq3, (ref_h3, ref_c3) = model.reference(inputs_long, (h0, c0))
    assert seq3.shape == (T_long, 1, hidden_size)
    np.testing.assert_allclose(np.asarray(seq3), ref_seq3, rtol=2e-5, atol=2e-5)
    np.testing.assert_allclose(np.asarray(h3), ref_h3, rtol=2e-5, atol=2e-5)
    np.testing.assert_allclose(np.asarray(c3), ref_c3, rtol=2e-5, atol=2e-5)

    print("KERNEL_OK")
</pallas_src>

<mosaic_0001>
module attributes {stable_mosaic.version = 11 : i64} {
  func.func @lstm_chunk_kernel(%arg0: i32, %arg1: memref<8x128xf32, #tpu.memory_space<vmem>>, %arg2: memref<1x32xf32, #tpu.memory_space<vmem>>, %arg3: memref<1x32xf32, #tpu.memory_space<vmem>>, %arg4: memref<32x128xf32, #tpu.memory_space<vmem>>, %arg5: memref<8x32xf32, #tpu.memory_space<vmem>>, %arg6: memref<2x32xf32, #tpu.memory_space<vmem>>, %arg7: memref<1x32xf32, #tpu.memory_space<vmem>>, %arg8: memref<1x32xf32, #tpu.memory_space<vmem>>) attributes {dimension_semantics = [#tpu.dimension_semantics<arbitrary>], iteration_bounds = array<i64: 1>, scalar_prefetch = 0 : i64, scratch_operands = 2 : i64, tpu.core_type = #tpu.core_type<tc>, window_params = [{transform_indices = @transform_0, window_bounds = array<i64: 8, 128>}, {pipeline_mode = #tpu.pipeline_mode<synchronous>, transform_indices = @transform_1, window_bounds = array<i64: 1, 32>}, {pipeline_mode = #tpu.pipeline_mode<synchronous>, transform_indices = @transform_2, window_bounds = array<i64: 1, 32>}, {pipeline_mode = #tpu.pipeline_mode<synchronous>, transform_indices = @transform_3, window_bounds = array<i64: 32, 128>}, {transform_indices = @transform_4, window_bounds = array<i64: 8, 32>}, {pipeline_mode = #tpu.pipeline_mode<synchronous>, transform_indices = @transform_5, window_bounds = array<i64: 2, 32>}]} {
    %c0_i32 = arith.constant 0 : i32
    %0 = arith.cmpi eq, %arg0, %c0_i32 : i32
    %1 = arith.extui %0 : i1 to i32
    %c0_i32_0 = arith.constant 0 : i32
    %2 = arith.cmpi ne, %1, %c0_i32_0 : i32
    scf.if %2 {
      %c0_53 = arith.constant 0 : index
      %c0_54 = arith.constant 0 : index
      %212 = vector.load %arg2[%c0_53, %c0_54] : memref<1x32xf32, #tpu.memory_space<vmem>>, vector<1x32xf32>
      %c0_55 = arith.constant 0 : index
      %c0_56 = arith.constant 0 : index
      %213 = vector.load %arg7[%c0_55, %c0_56] : memref<1x32xf32, #tpu.memory_space<vmem>>, vector<1x32xf32>
      tpu.vector_store %arg7[%c0_55, %c0_56], %212 {strides = array<i32>} : memref<1x32xf32, #tpu.memory_space<vmem>>, vector<1x32xf32>,
      %c0_57 = arith.constant 0 : index
      %c0_58 = arith.constant 0 : index
      %214 = vector.load %arg3[%c0_57, %c0_58] : memref<1x32xf32, #tpu.memory_space<vmem>>, vector<1x32xf32>
      %c0_59 = arith.constant 0 : index
      %c0_60 = arith.constant 0 : index
      %215 = vector.load %arg8[%c0_59, %c0_60] : memref<1x32xf32, #tpu.memory_space<vmem>>, vector<1x32xf32>
      tpu.vector_store %arg8[%c0_59, %c0_60], %214 {strides = array<i32>} : memref<1x32xf32, #tpu.memory_space<vmem>>, vector<1x32xf32>,
    } else {
    }
    %c0 = arith.constant 0 : index
    %c0_1 = arith.constant 0 : index
    %3 = vector.load %arg4[%c0, %c0_1] : memref<32x128xf32, #tpu.memory_space<vmem>>, vector<32x128xf32>
    %c8_i32 = arith.constant 8 : i32
    %4 = arith.muli %arg0, %c8_i32 : i32
    %c0_2 = arith.constant 0 : index
    %c0_3 = arith.constant 0 : index
    %5 = vector.load %arg7[%c0_2, %c0_3] : memref<1x32xf32, #tpu.memory_space<vmem>>, vector<1x32xf32>
    %c0_4 = arith.constant 0 : index
    %c0_5 = arith.constant 0 : index
    %6 = vector.load %arg8[%c0_4, %c0_5] : memref<1x32xf32, #tpu.memory_space<vmem>>, vector<1x32xf32>
    %c0_i32_6 = arith.constant 0 : i32
    %7 = arith.index_cast %c0_i32_6 : i32 to index
    %c0_7 = arith.constant 0 : index
    %8 = vector.load %arg1[%7, %c0_7] : memref<8x128xf32, #tpu.memory_space<vmem>>, vector<1x128xf32>
    %cst = arith.constant dense<0.000000e+00> : vector<1x128xf32>
    %9 = tpu.matmul %5, %3, %cst {dimension_numbers = #tpu.dot_dimension_numbers<[1], [0], [0], [1], [0, 0, 1, 1], [], []>} : vector<1x32xf32>, vector<32x128xf32>, vector<1x128xf32> -> vector<1x128xf32>
    %10 = arith.addf %8, %9 : vector<1x128xf32>
    %11 = arith.negf %10 : vector<1x128xf32>
    %12 = math.exp %11 : vector<1x128xf32>
    %cst_8 = arith.constant 1.000000e+00 : f32
    %13 = vector.broadcast %cst_8 : f32 to vector<1x128xf32>
    %14 = arith.addf %13, %12 : vector<1x128xf32>
    %15 = arith.divf %13, %14 : vector<1x128xf32>
    %16 = math.tanh %10 : vector<1x128xf32>
    %17 = vector.extract_strided_slice %15 {offsets = [0, 0], sizes = [1, 32], strides = [1, 1]} : vector<1x128xf32> to vector<1x32xf32>
    %18 = vector.extract_strided_slice %15 {offsets = [0, 32], sizes = [1, 32], strides = [1, 1]} : vector<1x128xf32> to vector<1x32xf32>
    %19 = vector.extract_strided_slice %16 {offsets = [0, 64], sizes = [1, 32], strides = [1, 1]} : vector<1x128xf32> to vector<1x32xf32>
    %20 = vector.extract_strided_slice %15 {offsets = [0, 96], sizes = [1, 32], strides = [1, 1]} : vector<1x128xf32> to vector<1x32xf32>
    %21 = arith.mulf %18, %6 : vector<1x32xf32>
    %22 = arith.mulf %17, %19 : vector<1x32xf32>
    %23 = arith.addf %21, %22 : vector<1x32xf32>
    %24 = math.tanh %23 : vector<1x32xf32>
    %25 = arith.mulf %20, %24 : vector<1x32xf32>
    %26 = arith.addi %4, %c0_i32_6 : i32
    %c1_i32 = arith.constant 1 : i32
    %27 = arith.cmpi slt, %26, %c1_i32 : i32
    %28 = arith.select %27, %25, %5 : vector<1x32xf32>
    %29 = arith.select %27, %23, %6 : vector<1x32xf32>
    %30 = arith.index_cast %c0_i32_6 : i32 to index
    %c0_9 = arith.constant 0 : index
    %31 = vector.load %arg5[%30, %c0_9] : memref<8x32xf32, #tpu.memory_space<vmem>>, vector<1x32xf32>
    tpu.vector_store %arg5[%30, %c0_9], %28 {strides = array<i32>} : memref<8x32xf32, #tpu.memory_space<vmem>>, vector<1x32xf32>,
    %c1_i32_10 = arith.constant 1 : i32
    %32 = arith.index_cast %c1_i32_10 : i32 to index
    %c0_11 = arith.constant 0 : index
    %33 = vector.load %arg1[%32, %c0_11] : memref<8x128xf32, #tpu.memory_space<vmem>>, vector<1x128xf32>
    %cst_12 = arith.constant dense<0.000000e+00> : vector<1x128xf32>
    %34 = tpu.matmul %28, %3, %cst_12 {dimension_numbers = #tpu.dot_dimension_numbers<[1], [0], [0], [1], [0, 0, 1, 1], [], []>} : vector<1x32xf32>, vector<32x128xf32>, vector<1x128xf32> -> vector<1x128xf32>
    %35 = arith.addf %33, %34 : vector<1x128xf32>
    %36 = arith.negf %35 : vector<1x128xf32>
    %37 = math.exp %36 : vector<1x128xf32>
    %cst_13 = arith.constant 1.000000e+00 : f32
    %38 = vector.broadcast %cst_13 : f32 to vector<1x128xf32>
    %39 = arith.addf %38, %37 : vector<1x128xf32>
    %40 = arith.divf %38, %39 : vector<1x128xf32>
    %41 = math.tanh %35 : vector<1x128xf32>
    %42 = vector.extract_strided_slice %40 {offsets = [0, 0], sizes = [1, 32], strides = [1, 1]} : vector<1x128xf32> to vector<1x32xf32>
    %43 = vector.extract_strided_slice %40 {offsets = [0, 32], sizes = [1, 32], strides = [1, 1]} : vector<1x128xf32> to vector<1x32xf32>
    %44 = vector.extract_strided_slice %41 {offsets = [0, 64], sizes = [1, 32], strides = [1, 1]} : vector<1x128xf32> to vector<1x32xf32>
    %45 = vector.extract_strided_slice %40 {offsets = [0, 96], sizes = [1, 32], strides = [1, 1]} : vector<1x128xf32> to vector<1x32xf32>
    %46 = arith.mulf %43, %29 : vector<1x32xf32>
    %47 = arith.mulf %42, %44 : vector<1x32xf32>
    %48 = arith.addf %46, %47 : vector<1x32xf32>
    %49 = math.tanh %48 : vector<1x32xf32>
    %50 = arith.mulf %45, %49 : vector<1x32xf32>
    %51 = arith.addi %4, %c1_i32_10 : i32
    %c1_i32_14 = arith.constant 1 : i32
    %52 = arith.cmpi slt, %51, %c1_i32_14 : i32
    %53 = arith.select %52, %50, %28 : vector<1x32xf32>
    %54 = arith.select %52, %48, %29 : vector<1x32xf32>
    %55 = arith.index_cast %c1_i32_10 : i32 to index
    %c0_15 = arith.constant 0 : index
    %56 = vector.load %arg5[%55, %c0_15] : memref<8x32xf32, #tpu.memory_space<vmem>>, vector<1x32xf32>
    tpu.vector_store %arg5[%55, %c0_15], %53 {strides = array<i32>} : memref<8x32xf32, #tpu.memory_space<vmem>>, vector<1x32xf32>,
    %c2_i32 = arith.constant 2 : i32
    %57 = arith.index_cast %c2_i32 : i32 to index
    %c0_16 = arith.constant 0 : index
    %58 = vector.load %arg1[%57, %c0_16] : memref<8x128xf32, #tpu.memory_space<vmem>>, vector<1x128xf32>
    %cst_17 = arith.constant dense<0.000000e+00> : vector<1x128xf32>
    %59 = tpu.matmul %53, %3, %cst_17 {dimension_numbers = #tpu.dot_dimension_numbers<[1], [0], [0], [1], [0, 0, 1, 1], [], []>} : vector<1x32xf32>, vector<32x128xf32>, vector<1x128xf32> -> vector<1x128xf32>
    %60 = arith.addf %58, %59 : vector<1x128xf32>
    %61 = arith.negf %60 : vector<1x128xf32>
    %62 = math.exp %61 : vector<1x128xf32>
    %cst_18 = arith.constant 1.000000e+00 : f32
    %63 = vector.broadcast %cst_18 : f32 to vector<1x128xf32>
    %64 = arith.addf %63, %62 : vector<1x128xf32>
    %65 = arith.divf %63, %64 : vector<1x128xf32>
    %66 = math.tanh %60 : vector<1x128xf32>
    %67 = vector.extract_strided_slice %65 {offsets = [0, 0], sizes = [1, 32], strides = [1, 1]} : vector<1x128xf32> to vector<1x32xf32>
    %68 = vector.extract_strided_slice %65 {offsets = [0, 32], sizes = [1, 32], strides = [1, 1]} : vector<1x128xf32> to vector<1x32xf32>
    %69 = vector.extract_strided_slice %66 {offsets = [0, 64], sizes = [1, 32], strides = [1, 1]} : vector<1x128xf32> to vector<1x32xf32>
    %70 = vector.extract_strided_slice %65 {offsets = [0, 96], sizes = [1, 32], strides = [1, 1]} : vector<1x128xf32> to vector<1x32xf32>
    %71 = arith.mulf %68, %54 : vector<1x32xf32>
    %72 = arith.mulf %67, %69 : vector<1x32xf32>
    %73 = arith.addf %71, %72 : vector<1x32xf32>
    %74 = math.tanh %73 : vector<1x32xf32>
    %75 = arith.mulf %70, %74 : vector<1x32xf32>
    %76 = arith.addi %4, %c2_i32 : i32
    %c1_i32_19 = arith.constant 1 : i32
    %77 = arith.cmpi slt, %76, %c1_i32_19 : i32
    %78 = arith.select %77, %75, %53 : vector<1x32xf32>
    %79 = arith.select %77, %73, %54 : vector<1x32xf32>
    %80 = arith.index_cast %c2_i32 : i32 to index
    %c0_20 = arith.constant 0 : index
    %81 = vector.load %arg5[%80, %c0_20] : memref<8x32xf32, #tpu.memory_space<vmem>>, vector<1x32xf32>
    tpu.vector_store %arg5[%80, %c0_20], %78 {strides = array<i32>} : memref<8x32xf32, #tpu.memory_space<vmem>>, vector<1x32xf32>,
    %c3_i32 = arith.constant 3 : i32
    %82 = arith.index_cast %c3_i32 : i32 to index
    %c0_21 = arith.constant 0 : index
    %83 = vector.load %arg1[%82, %c0_21] : memref<8x128xf32, #tpu.memory_space<vmem>>, vector<1x128xf32>
    %cst_22 = arith.constant dense<0.000000e+00> : vector<1x128xf32>
    %84 = tpu.matmul %78, %3, %cst_22 {dimension_numbers = #tpu.dot_dimension_numbers<[1], [0], [0], [1], [0, 0, 1, 1], [], []>} : vector<1x32xf32>, vector<32x128xf32>, vector<1x128xf32> -> vector<1x128xf32>
    %85 = arith.addf %83, %84 : vector<1x128xf32>
    %86 = arith.negf %85 : vector<1x128xf32>
    %87 = math.exp %86 : vector<1x128xf32>
    %cst_23 = arith.constant 1.000000e+00 : f32
    %88 = vector.broadcast %cst_23 : f32 to vector<1x128xf32>
    %89 = arith.addf %88, %87 : vector<1x128xf32>
    %90 = arith.divf %88, %89 : vector<1x128xf32>
    %91 = math.tanh %85 : vector<1x128xf32>
    %92 = vector.extract_strided_slice %90 {offsets = [0, 0], sizes = [1, 32], strides = [1, 1]} : vector<1x128xf32> to vector<1x32xf32>
    %93 = vector.extract_strided_slice %90 {offsets = [0, 32], sizes = [1, 32], strides = [1, 1]} : vector<1x128xf32> to vector<1x32xf32>
    %94 = vector.extract_strided_slice %91 {offsets = [0, 64], sizes = [1, 32], strides = [1, 1]} : vector<1x128xf32> to vector<1x32xf32>
    %95 = vector.extract_strided_slice %90 {offsets = [0, 96], sizes = [1, 32], strides = [1, 1]} : vector<1x128xf32> to vector<1x32xf32>
    %96 = arith.mulf %93, %79 : vector<1x32xf32>
    %97 = arith.mulf %92, %94 : vector<1x32xf32>
    %98 = arith.addf %96, %97 : vector<1x32xf32>
    %99 = math.tanh %98 : vector<1x32xf32>
    %100 = arith.mulf %95, %99 : vector<1x32xf32>
    %101 = arith.addi %4, %c3_i32 : i32
    %c1_i32_24 = arith.constant 1 : i32
    %102 = arith.cmpi slt, %101, %c1_i32_24 : i32
    %103 = arith.select %102, %100, %78 : vector<1x32xf32>
    %104 = arith.select %102, %98, %79 : vector<1x32xf32>
    %105 = arith.index_cast %c3_i32 : i32 to index
    %c0_25 = arith.constant 0 : index
    %106 = vector.load %arg5[%105, %c0_25] : memref<8x32xf32, #tpu.memory_space<vmem>>, vector<1x32xf32>
    tpu.vector_store %arg5[%105, %c0_25], %103 {strides = array<i32>} : memref<8x32xf32, #tpu.memory_space<vmem>>, vector<1x32xf32>,
    %c4_i32 = arith.constant 4 : i32
    %107 = arith.index_cast %c4_i32 : i32 to index
    %c0_26 = arith.constant 0 : index
    %108 = vector.load %arg1[%107, %c0_26] : memref<8x128xf32, #tpu.memory_space<vmem>>, vector<1x128xf32>
    %cst_27 = arith.constant dense<0.000000e+00> : vector<1x128xf32>
    %109 = tpu.matmul %103, %3, %cst_27 {dimension_numbers = #tpu.dot_dimension_numbers<[1], [0], [0], [1], [0, 0, 1, 1], [], []>} : vector<1x32xf32>, vector<32x128xf32>, vector<1x128xf32> -> vector<1x128xf32>
    %110 = arith.addf %108, %109 : vector<1x128xf32>
    %111 = arith.negf %110 : vector<1x128xf32>
    %112 = math.exp %111 : vector<1x128xf32>
    %cst_28 = arith.constant 1.000000e+00 : f32
    %113 = vector.broadcast %cst_28 : f32 to vector<1x128xf32>
    %114 = arith.addf %113, %112 : vector<1x128xf32>
    %115 = arith.divf %113, %114 : vector<1x128xf32>
    %116 = math.tanh %110 : vector<1x128xf32>
    %117 = vector.extract_strided_slice %115 {offsets = [0, 0], sizes = [1, 32], strides = [1, 1]} : vector<1x128xf32> to vector<1x32xf32>
    %118 = vector.extract_strided_slice %115 {offsets = [0, 32], sizes = [1, 32], strides = [1, 1]} : vector<1x128xf32> to vector<1x32xf32>
    %119 = vector.extract_strided_slice %116 {offsets = [0, 64], sizes = [1, 32], strides = [1, 1]} : vector<1x128xf32> to vector<1x32xf32>
    %120 = vector.extract_strided_slice %115 {offsets = [0, 96], sizes = [1, 32], strides = [1, 1]} : vector<1x128xf32> to vector<1x32xf32>
    %121 = arith.mulf %118, %104 : vector<1x32xf32>
    %122 = arith.mulf %117, %119 : vector<1x32xf32>
    %123 = arith.addf %121, %122 : vector<1x32xf32>
    %124 = math.tanh %123 : vector<1x32xf32>
    %125 = arith.mulf %120, %124 : vector<1x32xf32>
    %126 = arith.addi %4, %c4_i32 : i32
    %c1_i32_29 = arith.constant 1 : i32
    %127 = arith.cmpi slt, %126, %c1_i32_29 : i32
    %128 = arith.select %127, %125, %103 : vector<1x32xf32>
    %129 = arith.select %127, %123, %104 : vector<1x32xf32>
    %130 = arith.index_cast %c4_i32 : i32 to index
    %c0_30 = arith.constant 0 : index
    %131 = vector.load %arg5[%130, %c0_30] : memref<8x32xf32, #tpu.memory_space<vmem>>, vector<1x32xf32>
    tpu.vector_store %arg5[%130, %c0_30], %128 {strides = array<i32>} : memref<8x32xf32, #tpu.memory_space<vmem>>, vector<1x32xf32>,
    %c5_i32 = arith.constant 5 : i32
    %132 = arith.index_cast %c5_i32 : i32 to index
    %c0_31 = arith.constant 0 : index
    %133 = vector.load %arg1[%132, %c0_31] : memref<8x128xf32, #tpu.memory_space<vmem>>, vector<1x128xf32>
    %cst_32 = arith.constant dense<0.000000e+00> : vector<1x128xf32>
    %134 = tpu.matmul %128, %3, %cst_32 {dimension_numbers = #tpu.dot_dimension_numbers<[1], [0], [0], [1], [0, 0, 1, 1], [], []>} : vector<1x32xf32>, vector<32x128xf32>, vector<1x128xf32> -> vector<1x128xf32>
    %135 = arith.addf %133, %134 : vector<1x128xf32>
    %136 = arith.negf %135 : vector<1x128xf32>
    %137 = math.exp %136 : vector<1x128xf32>
    %cst_33 = arith.constant 1.000000e+00 : f32
    %138 = vector.broadcast %cst_33 : f32 to vector<1x128xf32>
    %139 = arith.addf %138, %137 : vector<1x128xf32>
    %140 = arith.divf %138, %139 : vector<1x128xf32>
    %141 = math.tanh %135 : vector<1x128xf32>
    %142 = vector.extract_strided_slice %140 {offsets = [0, 0], sizes = [1, 32], strides = [1, 1]} : vector<1x128xf32> to vector<1x32xf32>
    %143 = vector.extract_strided_slice %140 {offsets = [0, 32], sizes = [1, 32], strides = [1, 1]} : vector<1x128xf32> to vector<1x32xf32>
    %144 = vector.extract_strided_slice %141 {offsets = [0, 64], sizes = [1, 32], strides = [1, 1]} : vector<1x128xf32> to vector<1x32xf32>
    %145 = vector.extract_strided_slice %140 {offsets = [0, 96], sizes = [1, 32], strides = [1, 1]} : vector<1x128xf32> to vector<1x32xf32>
    %146 = arith.mulf %143, %129 : vector<1x32xf32>
    %147 = arith.mulf %142, %144 : vector<1x32xf32>
    %148 = arith.addf %146, %147 : vector<1x32xf32>
    %149 = math.tanh %148 : vector<1x32xf32>
    %150 = arith.mulf %145, %149 : vector<1x32xf32>
    %151 = arith.addi %4, %c5_i32 : i32
    %c1_i32_34 = arith.constant 1 : i32
    %152 = arith.cmpi slt, %151, %c1_i32_34 : i32
    %153 = arith.select %152, %150, %128 : vector<1x32xf32>
    %154 = arith.select %152, %148, %129 : vector<1x32xf32>
    %155 = arith.index_cast %c5_i32 : i32 to index
    %c0_35 = arith.constant 0 : index
    %156 = vector.load %arg5[%155, %c0_35] : memref<8x32xf32, #tpu.memory_space<vmem>>, vector<1x32xf32>
    tpu.vector_store %arg5[%155, %c0_35], %153 {strides = array<i32>} : memref<8x32xf32, #tpu.memory_space<vmem>>, vector<1x32xf32>,
    %c6_i32 = arith.constant 6 : i32
    %157 = arith.index_cast %c6_i32 : i32 to index
    %c0_36 = arith.constant 0 : index
    %158 = vector.load %arg1[%157, %c0_36] : memref<8x128xf32, #tpu.memory_space<vmem>>, vector<1x128xf32>
    %cst_37 = arith.constant dense<0.000000e+00> : vector<1x128xf32>
    %159 = tpu.matmul %153, %3, %cst_37 {dimension_numbers = #tpu.dot_dimension_numbers<[1], [0], [0], [1], [0, 0, 1, 1], [], []>} : vector<1x32xf32>, vector<32x128xf32>, vector<1x128xf32> -> vector<1x128xf32>
    %160 = arith.addf %158, %159 : vector<1x128xf32>
    %161 = arith.negf %160 : vector<1x128xf32>
    %162 = math.exp %161 : vector<1x128xf32>
    %cst_38 = arith.constant 1.000000e+00 : f32
    %163 = vector.broadcast %cst_38 : f32 to vector<1x128xf32>
    %164 = arith.addf %163, %162 : vector<1x128xf32>
    %165 = arith.divf %163, %164 : vector<1x128xf32>
    %166 = math.tanh %160 : vector<1x128xf32>
    %167 = vector.extract_strided_slice %165 {offsets = [0, 0], sizes = [1, 32], strides = [1, 1]} : vector<1x128xf32> to vector<1x32xf32>
    %168 = vector.extract_strided_slice %165 {offsets = [0, 32], sizes = [1, 32], strides = [1, 1]} : vector<1x128xf32> to vector<1x32xf32>
    %169 = vector.extract_strided_slice %166 {offsets = [0, 64], sizes = [1, 32], strides = [1, 1]} : vector<1x128xf32> to vector<1x32xf32>
    %170 = vector.extract_strided_slice %165 {offsets = [0, 96], sizes = [1, 32], strides = [1, 1]} : vector<1x128xf32> to vector<1x32xf32>
    %171 = arith.mulf %168, %154 : vector<1x32xf32>
    %172 = arith.mulf %167, %169 : vector<1x32xf32>
    %173 = arith.addf %171, %172 : vector<1x32xf32>
    %174 = math.tanh %173 : vector<1x32xf32>
    %175 = arith.mulf %170, %174 : vector<1x32xf32>
    %176 = arith.addi %4, %c6_i32 : i32
    %c1_i32_39 = arith.constant 1 : i32
    %177 = arith.cmpi slt, %176, %c1_i32_39 : i32
    %178 = arith.select %177, %175, %153 : vector<1x32xf32>
    %179 = arith.select %177, %173, %154 : vector<1x32xf32>
    %180 = arith.index_cast %c6_i32 : i32 to index
    %c0_40 = arith.constant 0 : index
    %181 = vector.load %arg5[%180, %c0_40] : memref<8x32xf32, #tpu.memory_space<vmem>>, vector<1x32xf32>
    tpu.vector_store %arg5[%180, %c0_40], %178 {strides = array<i32>} : memref<8x32xf32, #tpu.memory_space<vmem>>, vector<1x32xf32>,
    %c7_i32 = arith.constant 7 : i32
    %182 = arith.index_cast %c7_i32 : i32 to index
    %c0_41 = arith.constant 0 : index
    %183 = vector.load %arg1[%182, %c0_41] : memref<8x128xf32, #tpu.memory_space<vmem>>, vector<1x128xf32>
    %cst_42 = arith.constant dense<0.000000e+00> : vector<1x128xf32>
    %184 = tpu.matmul %178, %3, %cst_42 {dimension_numbers = #tpu.dot_dimension_numbers<[1], [0], [0], [1], [0, 0, 1, 1], [], []>} : vector<1x32xf32>, vector<32x128xf32>, vector<1x128xf32> -> vector<1x128xf32>
    %185 = arith.addf %183, %184 : vector<1x128xf32>
    %186 = arith.negf %185 : vector<1x128xf32>
    %187 = math.exp %186 : vector<1x128xf32>
    %cst_43 = arith.constant 1.000000e+00 : f32
    %188 = vector.broadcast %cst_43 : f32 to vector<1x128xf32>
    %189 = arith.addf %188, %187 : vector<1x128xf32>
    %190 = arith.divf %188, %189 : vector<1x128xf32>
    %191 = math.tanh %185 : vector<1x128xf32>
    %192 = vector.extract_strided_slice %190 {offsets = [0, 0], sizes = [1, 32], strides = [1, 1]} : vector<1x128xf32> to vector<1x32xf32>
    %193 = vector.extract_strided_slice %190 {offsets = [0, 32], sizes = [1, 32], strides = [1, 1]} : vector<1x128xf32> to vector<1x32xf32>
    %194 = vector.extract_strided_slice %191 {offsets = [0, 64], sizes = [1, 32], strides = [1, 1]} : vector<1x128xf32> to vector<1x32xf32>
    %195 = vector.extract_strided_slice %190 {offsets = [0, 96], sizes = [1, 32], strides = [1, 1]} : vector<1x128xf32> to vector<1x32xf32>
    %196 = arith.mulf %193, %179 : vector<1x32xf32>
    %197 = arith.mulf %192, %194 : vector<1x32xf32>
    %198 = arith.addf %196, %197 : vector<1x32xf32>
    %199 = math.tanh %198 : vector<1x32xf32>
    %200 = arith.mulf %195, %199 : vector<1x32xf32>
    %201 = arith.addi %4, %c7_i32 : i32
    %c1_i32_44 = arith.constant 1 : i32
    %202 = arith.cmpi slt, %201, %c1_i32_44 : i32
    %203 = arith.select %202, %200, %178 : vector<1x32xf32>
    %204 = arith.select %202, %198, %179 : vector<1x32xf32>
    %205 = arith.index_cast %c7_i32 : i32 to index
    %c0_45 = arith.constant 0 : index
    %206 = vector.load %arg5[%205, %c0_45] : memref<8x32xf32, #tpu.memory_space<vmem>>, vector<1x32xf32>
    tpu.vector_store %arg5[%205, %c0_45], %203 {strides = array<i32>} : memref<8x32xf32, #tpu.memory_space<vmem>>, vector<1x32xf32>,
    %c8_i32_46 = arith.constant 8 : i32
    %c0_47 = arith.constant 0 : index
    %c0_48 = arith.constant 0 : index
    %207 = vector.load %arg7[%c0_47, %c0_48] : memref<1x32xf32, #tpu.memory_space<vmem>>, vector<1x32xf32>
    tpu.vector_store %arg7[%c0_47, %c0_48], %203 {strides = array<i32>} : memref<1x32xf32, #tpu.memory_space<vmem>>, vector<1x32xf32>,
    %c0_49 = arith.constant 0 : index
    %c0_50 = arith.constant 0 : index
    %208 = vector.load %arg8[%c0_49, %c0_50] : memref<1x32xf32, #tpu.memory_space<vmem>>, vector<1x32xf32>
    tpu.vector_store %arg8[%c0_49, %c0_50], %204 {strides = array<i32>} : memref<1x32xf32, #tpu.memory_space<vmem>>, vector<1x32xf32>,
    %c0_i32_51 = arith.constant 0 : i32
    %209 = arith.cmpi eq, %arg0, %c0_i32_51 : i32
    %210 = arith.extui %209 : i1 to i32
    %c0_i32_52 = arith.constant 0 : i32
    %211 = arith.cmpi ne, %210, %c0_i32_52 : i32
    scf.if %211 {
      %c0_53 = arith.constant 0 : index
      %c0_54 = arith.constant 0 : index
      %212 = vector.load %arg6[%c0_53, %c0_54] : memref<2x32xf32, #tpu.memory_space<vmem>>, vector<1x32xf32>
      tpu.vector_store %arg6[%c0_53, %c0_54], %203 {strides = array<i32>} : memref<2x32xf32, #tpu.memory_space<vmem>>, vector<1x32xf32>,
      %c1 = arith.constant 1 : index
      %c0_55 = arith.constant 0 : index
      %213 = vector.load %arg6[%c1, %c0_55] : memref<2x32xf32, #tpu.memory_space<vmem>>, vector<1x32xf32>
      tpu.vector_store %arg6[%c1, %c0_55], %204 {strides = array<i32>} : memref<2x32xf32, #tpu.memory_space<vmem>>, vector<1x32xf32>,
    } else {
    }
    return
  }
  func.func @transform_0(%arg0: i32) -> (i32, i32) {
    %c0_i32 = arith.constant 0 : i32
    %c0_i32_0 = arith.constant 0 : i32
    return %arg0, %c0_i32 : i32, i32
  }
  func.func @transform_1(%arg0: i32) -> (i32, i32) {
    %c0_i32 = arith.constant 0 : i32
    %c0_i32_0 = arith.constant 0 : i32
    %c0_i32_1 = arith.constant 0 : i32
    return %c0_i32, %c0_i32_0 : i32, i32
  }
  func.func @transform_2(%arg0: i32) -> (i32, i32) {
    %c0_i32 = arith.constant 0 : i32
    %c0_i32_0 = arith.constant 0 : i32
    %c0_i32_1 = arith.constant 0 : i32
    return %c0_i32, %c0_i32_0 : i32, i32
  }
  func.func @transform_3(%arg0: i32) -> (i32, i32) {
    %c0_i32 = arith.constant 0 : i32
    %c0_i32_0 = arith.constant 0 : i32
    %c0_i32_1 = arith.constant 0 : i32
    return %c0_i32, %c0_i32_0 : i32, i32
  }
  func.func @transform_4(%arg0: i32) -> (i32, i32) {
    %c0_i32 = arith.constant 0 : i32
    %c0_i32_0 = arith.constant 0 : i32
    return %arg0, %c0_i32 : i32, i32
  }
  func.func @transform_5(%arg0: i32) -> (i32, i32) {
    %c0_i32 = arith.constant 0 : i32
    %c0_i32_0 = arith.constant 0 : i32
    %c0_i32_1 = arith.constant 0 : i32
    return %c0_i32, %c0_i32_0 : i32, i32
  }
}

</mosaic_0001>

<llo_original>
// kernel: lstm_forward_pallas.1
$region0: #{lstm_forward_pallas.1}
  #allocation0 [shape = 'u32[]', space=smem, size = 0x4, offset = 0x4, fixed_abs, tag = 'smem constant byte address 0x4 - core index']
  #allocation1 [shape = 'u32[72,128]{1,0:T(1,128)}', space=vmem, size = 0x9000, scoped, tag = 'internal scratch']
  #allocation2 [shape = 'f32[1,32]{1,0:T(1,128)}', space=vmem, size = 0x200, scoped, tag = 'scratch operand']
  #allocation3 [shape = 'f32[1,32]{1,0:T(1,128)}', space=vmem, size = 0x200, scoped, tag = 'scratch operand']
  %s0 = inlined_call_operand.vmem [shape: f32[8,128], index: 0, kind: input, shape index: {}]
  %s1 = inlined_call_operand.vmem [shape: f32[1,32], index: 1, kind: input, shape index: {}]
  %s2 = inlined_call_operand.vmem [shape: f32[1,32], index: 2, kind: input, shape index: {}]
  %s3 = inlined_call_operand.hbm [shape: f32[32,128], index: 3, kind: input, shape index: {}]
  %s4 = inlined_call_operand.vmem [shape: f32[8,32], index: 4, kind: output, shape index: {0}]
  %s5 = inlined_call_operand.hbm [shape: f32[2,32], index: 5, kind: output, shape index: {1}]
  %6 = xla_tuple %s4, %s5
  %s7 = sld [smem:[#allocation0]]
  $region46: #{lstm_forward_pallas.1} parent=0
    _
  %s9 = ssub.s32 1, %s7
  %s10 = scalar_select 0, %s9, %s7
  $region1: #{lstm_forward_pallas.1} parent=0
    #allocation4 [shape = 'u8[16384]{0}', space=vmem, size = 0x4000, scoped, tag = 'input window, operand 3, single buffered']
    #allocation5 [shape = 's32[1]{0}', space=sflag, size = 0x4, scoped, tag = 'scoped memory for lstm_forward_pallas.1']
    #allocation6 [shape = 's32[1]{0}', space=sflag, size = 0x4, scoped, tag = 'scoped memory for lstm_forward_pallas.1']
    #allocation7 [shape = 'u8[1024]{0}', space=vmem, size = 0x400, scoped, tag = 'output window, operand 1, single buffered']
    %11 = vsyncpa [#allocation5], 0
    %12 = vsyncpa [#allocation6], 0
    // Predicated region
    $region2: #{lstm_forward_pallas.1} parent=1 // pred_check
      _
    $region3: #{lstm_forward_pallas.1} parent=1 // pred_check_branch
      %14 = sbr.rel (0) target = $region5
    $region4: #{lstm_forward_pallas.1} parent=1 // pred_region
      _
    $region5: #{lstm_forward_pallas.1} parent=1 // pred_fallthru
      _
    // Predicated region
    $region6: #{lstm_forward_pallas.1} parent=1 // pred_check
      _
    $region7: #{lstm_forward_pallas.1} parent=1 // pred_check_branch
      %16 = sbr.rel (0) target = $region9
    $region8: #{lstm_forward_pallas.1} parent=1 // pred_region
      _
    $region9: #{lstm_forward_pallas.1} parent=1 // pred_fallthru
      _
    // Predicated region
    $region10: #{lstm_forward_pallas.1} parent=1 // pred_check
      _
    $region11: #{lstm_forward_pallas.1} parent=1 // pred_check_branch
      %18 = sbr.rel (0) target = $region13
    $region12: #{lstm_forward_pallas.1} parent=1 // pred_region
      _
    $region13: #{lstm_forward_pallas.1} parent=1 // pred_fallthru
      _
    // Predicated region
    $region14: #{lstm_forward_pallas.1} parent=1 // pred_check
      _
    $region15: #{lstm_forward_pallas.1} parent=1 // pred_check_branch
      %20 = sbr.rel (0) target = $region17
    $region16: #{lstm_forward_pallas.1} parent=1 // pred_region
      %22 = vsyncadd [#allocation5], 0
      %s23 = sshll.u32 %s3, 4
      %s24 = int_to_ptr.hbm [resolvable:$true] %s23
      %s25 = sshll.u32 [#allocation4], 4
      %s26 = int_to_ptr.vmem [resolvable:$true] %s25
      %31 = dma.hbm_to_vmem [thread:$0]  %s24, 512, %s26, [#allocation5], 128, 128, 8
    $region17: #{lstm_forward_pallas.1} parent=1 // pred_fallthru
      _
    // Predicated region
    $region18: #{lstm_forward_pallas.1} parent=1 // pred_check
      _
    $region19: #{lstm_forward_pallas.1} parent=1 // pred_check_branch
      %33 = sbr.rel (0) target = $region21
    $region20: #{lstm_forward_pallas.1} parent=1 // pred_region
      %35 = dma.done [#allocation5], 512
    $region21: #{lstm_forward_pallas.1} parent=1 // pred_fallthru
      _
    %p36 = scmp.eq.s32.totalorder 0, 0
    // Predicated region
    $region22: #{lstm_forward_pallas.1} parent=1 // pred_check
      %p37 = pneg %p36
    $region23: #{lstm_forward_pallas.1} parent=1 // pred_check_branch
      %39 = sbr.rel (%p37) target = $region25
    $region24: #{lstm_forward_pallas.1} parent=1 // pred_region
      %v40 = vld [vmem:[%s1] sm:$0x1]
      %vm41 = vcmask 253952
      %42 = vst.msk [vmem:[#allocation2] sm:$0x1] %vm41, %v40
      %v43 = vld [vmem:[%s2] sm:$0x1]
      %44 = vst.msk [vmem:[#allocation3] sm:$0x1] %vm41, %v43
    $region25: #{lstm_forward_pallas.1} parent=1 // pred_fallthru
      _
    %v45 = vld [vmem:[#allocation4] sm:$0xff]
    %v46 = vld [vmem:[#allocation4 + $0x8] sm:$0xff]
    %v47 = vld [vmem:[#allocation4 + $0x10] sm:$0xff]
    %v48 = vld [vmem:[#allocation4 + $0x18] sm:$0xff]
    %s49 = smul.u32 0, 8
    %v50 = vld [vmem:[#allocation2] sm:$0x1]
    %v51 = vld [vmem:[#allocation3] sm:$0x1]
    %v52 = vld [vmem:[%s0] sm:$0x1]
    %vm53 = vcmask 261120
    %v55 = vsel %vm53, %v50, 0
    %57 = vmatpush.msra.mxu0 0.0
    %58 = vmatpush.msra.mxu0 0.0
    %59 = vmatpush.msra.mxu0 0.0
    %60 = vmatpush.msra.mxu0 0.0
    %61 = vmatpush.msra.mxu0 0.0
    %62 = vmatpush.msra.mxu0 0.0
    %63 = vmatpush.msra.mxu0 0.0
    %64 = vmatpush.msra.mxu0 0.0
    %65 = vmatpush.msra.mxu0 0.0
    %66 = vmatpush.msra.mxu0 0.0
    %67 = vmatpush.msra.mxu0 0.0
    %68 = vmatpush.msra.mxu0 0.0
    %69 = vmatpush.msra.mxu0 %v48
    %70 = vmatpush.msra.mxu0 %v47
    %71 = vmatpush.msra.mxu0 %v46
    %72 = vmatpush.msra.mxu0 %v45
    %73 = vmatmul.f32.gmra.mxu0 %v55
    %v74 = vpop.f32.mrf.mxu0
    %v75 = vadd.f32 0.0, %v74
    %76 = vdwg.mxu0
    %v77 = vadd.f32 %v52, %v75
    %v78 = vxor.u32 %v77, 2147483648
    %v79 = vmul.f32 %v78, 1.442695
    %v80 = vpow.pop %v79
    %v81 = vadd.f32 %v80, 1.0
    %v82 = vrcp.pop %v81
    %v83 = vmul.f32 %v81, %v82
    %v84 = vsub.f32 1.0, %v83
    %v85 = vmul.f32 %v82, %v84
    %v86 = vadd.f32 %v82, %v85
    %vm87 = vweird.f32 %v81
    %vm88 = vweird.f32 %v82
    %vm89 = vmor %vm87, %vm88
    %v90 = vsel %vm89, %v82, %v86
    %v91 = vand.u32 2147483647, %v81
    %vm92 = vcmp.eq.f32.partialorder %v91, 8.507059e+37
    %v93 = vand.u32 %v81, 2147483648
    %v94 = vor.u32 1.1754944e-38, %v93
    %v95 = vsel %vm92, %v94, %v90
    %v96 = vmul.f32 1.0, %v95
    %v97 = vtanh.pop %v77
    %v99 = vperm.slane %v51, 0
    %100 = vrot.lane.b32.xlu0 %v99, 32
    %v101 = vpop.permute.xlu0 %100
    %v103 = vmul.f32 %v96, %v101
    %105 = vrot.lane.b32.xlu0 %v97, 64
    %v106 = vpop.permute.xlu0 %105
    %v108 = vmul.f32 %v96, %v106
    %110 = vrot.lane.b32.xlu0 %v108, 32
    %v111 = vpop.permute.xlu0 %110
    %v113 = vadd.f32 %v103, %v111
    %v114 = vtanh.pop %v113
    %116 = vrot.lane.b32.xlu0 %v114, 64
    %v117 = vpop.permute.xlu0 %116
    %v119 = vmul.f32 %v96, %v117
    %p120 = scmp.lt.s32.totalorder %s49, 1
    %s121 = scalar_select %p120, 1, 0
    %v122 = vstv %s121
    %vm123 = vcmp.eq.s32.totalorder %v122, 1
    %v124 = vperm.slane %v50, 0
    %125 = vrot.lane.b32.xlu0 %v124, 96
    %v126 = vpop.permute.xlu0 %125
    %v128 = vsel %vm123, %v119, %v126
    %v129 = vsel %vm123, %v113, %v101
    %131 = vrot.lane.b32.xlu0 %v128, 32
    %v132 = vpop.permute.xlu0 %131
    %vm134 = vcmask 253952
    %135 = vst.msk [vmem:[%s4] sm:$0x1] %vm134, %v132
    %v136 = vld [vmem:[%s0 + $0x1] sm:$0x1]
    %v137 = vsel %vm53, %v132, 0
    %139 = vmatpush.msra.mxu0 0.0
    %140 = vmatpush.msra.mxu0 0.0
    %141 = vmatpush.msra.mxu0 0.0
    %142 = vmatpush.msra.mxu0 0.0
    %143 = vmatpush.msra.mxu0 0.0
    %144 = vmatpush.msra.mxu0 0.0
    %145 = vmatpush.msra.mxu0 0.0
    %146 = vmatpush.msra.mxu0 0.0
    %147 = vmatpush.msra.mxu0 0.0
    %148 = vmatpush.msra.mxu0 0.0
    %149 = vmatpush.msra.mxu0 0.0
    %150 = vmatpush.msra.mxu0 0.0
    %151 = vmatpush.msra.mxu0 %v48
    %152 = vmatpush.msra.mxu0 %v47
    %153 = vmatpush.msra.mxu0 %v46
    %154 = vmatpush.msra.mxu0 %v45
    %155 = vmatmul.f32.gmra.mxu0 %v137
    %v156 = vpop.f32.mrf.mxu0
    %v157 = vadd.f32 0.0, %v156
    %158 = vdwg.mxu0
    %v159 = vadd.f32 %v136, %v157
    %v160 = vxor.u32 %v159, 2147483648
    %v161 = vmul.f32 %v160, 1.442695
    %v162 = vpow.pop %v161
    %v163 = vadd.f32 %v162, 1.0
    %v164 = vrcp.pop %v163
    %v165 = vmul.f32 %v163, %v164
    %v166 = vsub.f32 1.0, %v165
    %v167 = vmul.f32 %v164, %v166
    %v168 = vadd.f32 %v164, %v167
    %vm169 = vweird.f32 %v163
    %vm170 = vweird.f32 %v164
    %vm171 = vmor %vm169, %vm170
    %v172 = vsel %vm171, %v164, %v168
    %v173 = vand.u32 2147483647, %v163
    %vm174 = vcmp.eq.f32.partialorder %v173, 8.507059e+37
    %v175 = vand.u32 %v163, 2147483648
    %v176 = vor.u32 1.1754944e-38, %v175
    %v177 = vsel %vm174, %v176, %v172
    %v178 = vmul.f32 1.0, %v177
    %v179 = vtanh.pop %v159
    %v180 = vmul.f32 %v178, %v129
    %182 = vrot.lane.b32.xlu0 %v179, 64
    %v183 = vpop.permute.xlu0 %182
    %v185 = vmul.f32 %v178, %v183
    %187 = vrot.lane.b32.xlu0 %v185, 32
    %v188 = vpop.permute.xlu0 %187
    %v190 = vadd.f32 %v180, %v188
    %v191 = vtanh.pop %v190
    %193 = vrot.lane.b32.xlu0 %v191, 64
    %v194 = vpop.permute.xlu0 %193
    %v196 = vmul.f32 %v178, %v194
    %s197 = sadd.s32 %s49, 1
    %p198 = scmp.lt.s32.totalorder %s197, 1
    %s199 = scalar_select %p198, 1, 0
    %v200 = vstv %s199
    %vm201 = vcmp.eq.s32.totalorder %v200, 1
    %v202 = vsel %vm201, %v196, %v128
    %v203 = vsel %vm201, %v190, %v129
    %205 = vrot.lane.b32.xlu0 %v202, 32
    %v206 = vpop.permute.xlu0 %205
    %208 = vst.msk [vmem:[%s4 + $0x1] sm:$0x1] %vm134, %v206
    %v209 = vld [vmem:[%s0 + $0x2] sm:$0x1]
    %v210 = vsel %vm53, %v206, 0
    %212 = vmatpush.msra.mxu0 0.0
    %213 = vmatpush.msra.mxu0 0.0
    %214 = vmatpush.msra.mxu0 0.0
    %215 = vmatpush.msra.mxu0 0.0
    %216 = vmatpush.msra.mxu0 0.0
    %217 = vmatpush.msra.mxu0 0.0
    %218 = vmatpush.msra.mxu0 0.0
    %219 = vmatpush.msra.mxu0 0.0
    %220 = vmatpush.msra.mxu0 0.0
    %221 = vmatpush.msra.mxu0 0.0
    %222 = vmatpush.msra.mxu0 0.0
    %223 = vmatpush.msra.mxu0 0.0
    %224 = vmatpush.msra.mxu0 %v48
    %225 = vmatpush.msra.mxu0 %v47
    %226 = vmatpush.msra.mxu0 %v46
    %227 = vmatpush.msra.mxu0 %v45
    %228 = vmatmul.f32.gmra.mxu0 %v210
    %v229 = vpop.f32.mrf.mxu0
    %v230 = vadd.f32 0.0, %v229
    %231 = vdwg.mxu0
    %v232 = vadd.f32 %v209, %v230
    %v233 = vxor.u32 %v232, 2147483648
    %v234 = vmul.f32 %v233, 1.442695
    %v235 = vpow.pop %v234
    %v236 = vadd.f32 %v235, 1.0
    %v237 = vrcp.pop %v236
    %v238 = vmul.f32 %v236, %v237
    %v239 = vsub.f32 1.0, %v238
    %v240 = vmul.f32 %v237, %v239
    %v241 = vadd.f32 %v237, %v240
    %vm242 = vweird.f32 %v236
    %vm243 = vweird.f32 %v237
    %vm244 = vmor %vm242, %vm243
    %v245 = vsel %vm244, %v237, %v241
    %v246 = vand.u32 2147483647, %v236
    %vm247 = vcmp.eq.f32.partialorder %v246, 8.507059e+37
    %v248 = vand.u32 %v236, 2147483648
    %v249 = vor.u32 1.1754944e-38, %v248
    %v250 = vsel %vm247, %v249, %v245
    %v251 = vmul.f32 1.0, %v250
    %v252 = vtanh.pop %v232
    %v253 = vmul.f32 %v251, %v203
    %255 = vrot.lane.b32.xlu0 %v252, 64
    %v256 = vpop.permute.xlu0 %255
    %v258 = vmul.f32 %v251, %v256
    %260 = vrot.lane.b32.xlu0 %v258, 32
    %v261 = vpop.permute.xlu0 %260
    %v263 = vadd.f32 %v253, %v261
    %v264 = vtanh.pop %v263
    %266 = vrot.lane.b32.xlu0 %v264, 64
    %v267 = vpop.permute.xlu0 %266
    %v269 = vmul.f32 %v251, %v267
    %s270 = sadd.s32 %s49, 2
    %p271 = scmp.lt.s32.totalorder %s270, 1
    %s272 = scalar_select %p271, 1, 0
    %v273 = vstv %s272
    %vm274 = vcmp.eq.s32.totalorder %v273, 1
    %v275 = vsel %vm274, %v269, %v202
    %v276 = vsel %vm274, %v263, %v203
    %278 = vrot.lane.b32.xlu0 %v275, 32
    %v279 = vpop.permute.xlu0 %278
    %281 = vst.msk [vmem:[%s4 + $0x2] sm:$0x1] %vm134, %v279
    %v282 = vld [vmem:[%s0 + $0x3] sm:$0x1]
    %v283 = vsel %vm53, %v279, 0
    %285 = vmatpush.msra.mxu0 0.0
    %286 = vmatpush.msra.mxu0 0.0
    %287 = vmatpush.msra.mxu0 0.0
    %288 = vmatpush.msra.mxu0 0.0
    %289 = vmatpush.msra.mxu0 0.0
    %290 = vmatpush.msra.mxu0 0.0
    %291 = vmatpush.msra.mxu0 0.0
    %292 = vmatpush.msra.mxu0 0.0
    %293 = vmatpush.msra.mxu0 0.0
    %294 = vmatpush.msra.mxu0 0.0
    %295 = vmatpush.msra.mxu0 0.0
    %296 = vmatpush.msra.mxu0 0.0
    %297 = vmatpush.msra.mxu0 %v48
    %298 = vmatpush.msra.mxu0 %v47
    %299 = vmatpush.msra.mxu0 %v46
    %300 = vmatpush.msra.mxu0 %v45
    %301 = vmatmul.f32.gmra.mxu0 %v283
    %v302 = vpop.f32.mrf.mxu0
    %v303 = vadd.f32 0.0, %v302
    %304 = vdwg.mxu0
    %v305 = vadd.f32 %v282, %v303
    %v306 = vxor.u32 %v305, 2147483648
    %v307 = vmul.f32 %v306, 1.442695
    %v308 = vpow.pop %v307
    %v309 = vadd.f32 %v308, 1.0
    %v310 = vrcp.pop %v309
    %v311 = vmul.f32 %v309, %v310
    %v312 = vsub.f32 1.0, %v311
    %v313 = vmul.f32 %v310, %v312
    %v314 = vadd.f32 %v310, %v313
    %vm315 = vweird.f32 %v309
    %vm316 = vweird.f32 %v310
    %vm317 = vmor %vm315, %vm316
    %v318 = vsel %vm317, %v310, %v314
    %v319 = vand.u32 2147483647, %v309
    %vm320 = vcmp.eq.f32.partialorder %v319, 8.507059e+37
    %v321 = vand.u32 %v309, 2147483648
    %v322 = vor.u32 1.1754944e-38, %v321
    %v323 = vsel %vm320, %v322, %v318
    %v324 = vmul.f32 1.0, %v323
    %v325 = vtanh.pop %v305
    %v326 = vmul.f32 %v324, %v276
    %328 = vrot.lane.b32.xlu0 %v325, 64
    %v329 = vpop.permute.xlu0 %328
    %v331 = vmul.f32 %v324, %v329
    %333 = vrot.lane.b32.xlu0 %v331, 32
    %v334 = vpop.permute.xlu0 %333
    %v336 = vadd.f32 %v326, %v334
    %v337 = vtanh.pop %v336
    %339 = vrot.lane.b32.xlu0 %v337, 64
    %v340 = vpop.permute.xlu0 %339
    %v342 = vmul.f32 %v324, %v340
    %s343 = sadd.s32 %s49, 3
    %p344 = scmp.lt.s32.totalorder %s343, 1
    %s345 = scalar_select %p344, 1, 0
    %v346 = vstv %s345
    %vm347 = vcmp.eq.s32.totalorder %v346, 1
    %v348 = vsel %vm347, %v342, %v275
    %v349 = vsel %vm347, %v336, %v276
    %351 = vrot.lane.b32.xlu0 %v348, 32
    %v352 = vpop.permute.xlu0 %351
    %354 = vst.msk [vmem:[%s4 + $0x3] sm:$0x1] %vm134, %v352
    %v355 = vld [vmem:[%s0 + $0x4] sm:$0x1]
    %v356 = vsel %vm53, %v352, 0
    %358 = vmatpush.msra.mxu0 0.0
    %359 = vmatpush.msra.mxu0 0.0
    %360 = vmatpush.msra.mxu0 0.0
    %361 = vmatpush.msra.mxu0 0.0
    %362 = vmatpush.msra.mxu0 0.0
    %363 = vmatpush.msra.mxu0 0.0
    %364 = vmatpush.msra.mxu0 0.0
    %365 = vmatpush.msra.mxu0 0.0
    %366 = vmatpush.msra.mxu0 0.0
    %367 = vmatpush.msra.mxu0 0.0
    %368 = vmatpush.msra.mxu0 0.0
    %369 = vmatpush.msra.mxu0 0.0
    %370 = vmatpush.msra.mxu0 %v48
    %371 = vmatpush.msra.mxu0 %v47
    %372 = vmatpush.msra.mxu0 %v46
    %373 = vmatpush.msra.mxu0 %v45
    %374 = vmatmul.f32.gmra.mxu0 %v356
    %v375 = vpop.f32.mrf.mxu0
    %v376 = vadd.f32 0.0, %v375
    %377 = vdwg.mxu0
    %v378 = vadd.f32 %v355, %v376
    %v379 = vxor.u32 %v378, 2147483648
    %v380 = vmul.f32 %v379, 1.442695
    %v381 = vpow.pop %v380
    %v382 = vadd.f32 %v381, 1.0
    %v383 = vrcp.pop %v382
    %v384 = vmul.f32 %v382, %v383
    %v385 = vsub.f32 1.0, %v384
    %v386 = vmul.f32 %v383, %v385
    %v387 = vadd.f32 %v383, %v386
    %vm388 = vweird.f32 %v382
    %vm389 = vweird.f32 %v383
    %vm390 = vmor %vm388, %vm389
    %v391 = vsel %vm390, %v383, %v387
    %v392 = vand.u32 2147483647, %v382
    %vm393 = vcmp.eq.f32.partialorder %v392, 8.507059e+37
    %v394 = vand.u32 %v382, 2147483648
    %v395 = vor.u32 1.1754944e-38, %v394
    %v396 = vsel %vm393, %v395, %v391
    %v397 = vmul.f32 1.0, %v396
    %v398 = vtanh.pop %v378
    %v399 = vmul.f32 %v397, %v349
    %401 = vrot.lane.b32.xlu0 %v398, 64
    %v402 = vpop.permute.xlu0 %401
    %v404 = vmul.f32 %v397, %v402
    %406 = vrot.lane.b32.xlu0 %v404, 32
    %v407 = vpop.permute.xlu0 %406
    %v409 = vadd.f32 %v399, %v407
    %v410 = vtanh.pop %v409
    %412 = vrot.lane.b32.xlu0 %v410, 64
    %v413 = vpop.permute.xlu0 %412
    %v415 = vmul.f32 %v397, %v413
    %s416 = sadd.s32 %s49, 4
    %p417 = scmp.lt.s32.totalorder %s416, 1
    %s418 = scalar_select %p417, 1, 0
    %v419 = vstv %s418
    %vm420 = vcmp.eq.s32.totalorder %v419, 1
    %v421 = vsel %vm420, %v415, %v348
    %v422 = vsel %vm420, %v409, %v349
    %424 = vrot.lane.b32.xlu0 %v421, 32
    %v425 = vpop.permute.xlu0 %424
    %427 = vst.msk [vmem:[%s4 + $0x4] sm:$0x1] %vm134, %v425
    %v428 = vld [vmem:[%s0 + $0x5] sm:$0x1]
    %v429 = vsel %vm53, %v425, 0
    %431 = vmatpush.msra.mxu0 0.0
    %432 = vmatpush.msra.mxu0 0.0
    %433 = vmatpush.msra.mxu0 0.0
    %434 = vmatpush.msra.mxu0 0.0
    %435 = vmatpush.msra.mxu0 0.0
    %436 = vmatpush.msra.mxu0 0.0
    %437 = vmatpush.msra.mxu0 0.0
    %438 = vmatpush.msra.mxu0 0.0
    %439 = vmatpush.msra.mxu0 0.0
    %440 = vmatpush.msra.mxu0 0.0
    %441 = vmatpush.msra.mxu0 0.0
    %442 = vmatpush.msra.mxu0 0.0
    %443 = vmatpush.msra.mxu0 %v48
    %444 = vmatpush.msra.mxu0 %v47
    %445 = vmatpush.msra.mxu0 %v46
    %446 = vmatpush.msra.mxu0 %v45
    %447 = vmatmul.f32.gmra.mxu0 %v429
    %v448 = vpop.f32.mrf.mxu0
    %v449 = vadd.f32 0.0, %v448
    %450 = vdwg.mxu0
    %v451 = vadd.f32 %v428, %v449
    %v452 = vxor.u32 %v451, 2147483648
    %v453 = vmul.f32 %v452, 1.442695
    %v454 = vpow.pop %v453
    %v455 = vadd.f32 %v454, 1.0
    %v456 = vrcp.pop %v455
    %v457 = vmul.f32 %v455, %v456
    %v458 = vsub.f32 1.0, %v457
    %v459 = vmul.f32 %v456, %v458
    %v460 = vadd.f32 %v456, %v459
    %vm461 = vweird.f32 %v455
    %vm462 = vweird.f32 %v456
    %vm463 = vmor %vm461, %vm462
    %v464 = vsel %vm463, %v456, %v460
    %v465 = vand.u32 2147483647, %v455
    %vm466 = vcmp.eq.f32.partialorder %v465, 8.507059e+37
    %v467 = vand.u32 %v455, 2147483648
    %v468 = vor.u32 1.1754944e-38, %v467
    %v469 = vsel %vm466, %v468, %v464
    %v470 = vmul.f32 1.0, %v469
    %v471 = vtanh.pop %v451
    %v472 = vmul.f32 %v470, %v422
    %474 = vrot.lane.b32.xlu0 %v471, 64
    %v475 = vpop.permute.xlu0 %474
    %v477 = vmul.f32 %v470, %v475
    %479 = vrot.lane.b32.xlu0 %v477, 32
    %v480 = vpop.permute.xlu0 %479
    %v482 = vadd.f32 %v472, %v480
    %v483 = vtanh.pop %v482
    %485 = vrot.lane.b32.xlu0 %v483, 64
    %v486 = vpop.permute.xlu0 %485
    %v488 = vmul.f32 %v470, %v486
    %s489 = sadd.s32 %s49, 5
    %p490 = scmp.lt.s32.totalorder %s489, 1
    %s491 = scalar_select %p490, 1, 0
    %v492 = vstv %s491
    %vm493 = vcmp.eq.s32.totalorder %v492, 1
    %v494 = vsel %vm493, %v488, %v421
    %v495 = vsel %vm493, %v482, %v422
    %497 = vrot.lane.b32.xlu0 %v494, 32
    %v498 = vpop.permute.xlu0 %497
    %500 = vst.msk [vmem:[%s4 + $0x5] sm:$0x1] %vm134, %v498
    %v501 = vld [vmem:[%s0 + $0x6] sm:$0x1]
    %v502 = vsel %vm53, %v498, 0
    %504 = vmatpush.msra.mxu0 0.0
    %505 = vmatpush.msra.mxu0 0.0
    %506 = vmatpush.msra.mxu0 0.0
    %507 = vmatpush.msra.mxu0 0.0
    %508 = vmatpush.msra.mxu0 0.0
    %509 = vmatpush.msra.mxu0 0.0
    %510 = vmatpush.msra.mxu0 0.0
    %511 = vmatpush.msra.mxu0 0.0
    %512 = vmatpush.msra.mxu0 0.0
    %513 = vmatpush.msra.mxu0 0.0
    %514 = vmatpush.msra.mxu0 0.0
    %515 = vmatpush.msra.mxu0 0.0
    %516 = vmatpush.msra.mxu0 %v48
    %517 = vmatpush.msra.mxu0 %v47
    %518 = vmatpush.msra.mxu0 %v46
    %519 = vmatpush.msra.mxu0 %v45
    %520 = vmatmul.f32.gmra.mxu0 %v502
    %v521 = vpop.f32.mrf.mxu0
    %v522 = vadd.f32 0.0, %v521
    %523 = vdwg.mxu0
    %v524 = vadd.f32 %v501, %v522
    %v525 = vxor.u32 %v524, 2147483648
    %v526 = vmul.f32 %v525, 1.442695
    %v527 = vpow.pop %v526
    %v528 = vadd.f32 %v527, 1.0
    %v529 = vrcp.pop %v528
    %v530 = vmul.f32 %v528, %v529
    %v531 = vsub.f32 1.0, %v530
    %v532 = vmul.f32 %v529, %v531
    %v533 = vadd.f32 %v529, %v532
    %vm534 = vweird.f32 %v528
    %vm535 = vweird.f32 %v529
    %vm536 = vmor %vm534, %vm535
    %v537 = vsel %vm536, %v529, %v533
    %v538 = vand.u32 2147483647, %v528
    %vm539 = vcmp.eq.f32.partialorder %v538, 8.507059e+37
    %v540 = vand.u32 %v528, 2147483648
    %v541 = vor.u32 1.1754944e-38, %v540
    %v542 = vsel %vm539, %v541, %v537
    %v543 = vmul.f32 1.0, %v542
    %v544 = vtanh.pop %v524
    %v545 = vmul.f32 %v543, %v495
    %547 = vrot.lane.b32.xlu0 %v544, 64
    %v548 = vpop.permute.xlu0 %547
    %v550 = vmul.f32 %v543, %v548
    %552 = vrot.lane.b32.xlu0 %v550, 32
    %v553 = vpop.permute.xlu0 %552
    %v555 = vadd.f32 %v545, %v553
    %v556 = vtanh.pop %v555
    %558 = vrot.lane.b32.xlu0 %v556, 64
    %v559 = vpop.permute.xlu0 %558
    %v561 = vmul.f32 %v543, %v559
    %s562 = sadd.s32 %s49, 6
    %p563 = scmp.lt.s32.totalorder %s562, 1
    %s564 = scalar_select %p563, 1, 0
    %v565 = vstv %s564
    %vm566 = vcmp.eq.s32.totalorder %v565, 1
    %v567 = vsel %vm566, %v561, %v494
    %v568 = vsel %vm566, %v555, %v495
    %570 = vrot.lane.b32.xlu0 %v567, 32
    %v571 = vpop.permute.xlu0 %570
    %573 = vst.msk [vmem:[%s4 + $0x6] sm:$0x1] %vm134, %v571
    %v574 = vld [vmem:[%s0 + $0x7] sm:$0x1]
    %v575 = vsel %vm53, %v571, 0
    %577 = vmatpush.msra.mxu0 0.0
    %578 = vmatpush.msra.mxu0 0.0
    %579 = vmatpush.msra.mxu0 0.0
    %580 = vmatpush.msra.mxu0 0.0
    %581 = vmatpush.msra.mxu0 0.0
    %582 = vmatpush.msra.mxu0 0.0
    %583 = vmatpush.msra.mxu0 0.0
    %584 = vmatpush.msra.mxu0 0.0
    %585 = vmatpush.msra.mxu0 0.0
    %586 = vmatpush.msra.mxu0 0.0
    %587 = vmatpush.msra.mxu0 0.0
    %588 = vmatpush.msra.mxu0 0.0
    %589 = vmatpush.msra.mxu0 %v48
    %590 = vmatpush.msra.mxu0 %v47
    %591 = vmatpush.msra.mxu0 %v46
    %592 = vmatpush.msra.mxu0 %v45
    %593 = vmatmul.f32.gmra.mxu0 %v575
    %v594 = vpop.f32.mrf.mxu0
    %v595 = vadd.f32 0.0, %v594
    %596 = vdwg.mxu0
    %v597 = vadd.f32 %v574, %v595
    %v598 = vxor.u32 %v597, 2147483648
    %v599 = vmul.f32 %v598, 1.442695
    %v600 = vpow.pop %v599
    %v601 = vadd.f32 %v600, 1.0
    %v602 = vrcp.pop %v601
    %v603 = vmul.f32 %v601, %v602
    %v604 = vsub.f32 1.0, %v603
    %v605 = vmul.f32 %v602, %v604
    %v606 = vadd.f32 %v602, %v605
    %vm607 = vweird.f32 %v601
    %vm608 = vweird.f32 %v602
    %vm609 = vmor %vm607, %vm608
    %v610 = vsel %vm609, %v602, %v606
    %v611 = vand.u32 2147483647, %v601
    %vm612 = vcmp.eq.f32.partialorder %v611, 8.507059e+37
    %v613 = vand.u32 %v601, 2147483648
    %v614 = vor.u32 1.1754944e-38, %v613
    %v615 = vsel %vm612, %v614, %v610
    %v616 = vmul.f32 1.0, %v615
    %v617 = vtanh.pop %v597
    %v618 = vmul.f32 %v616, %v568
    %620 = vrot.lane.b32.xlu0 %v617, 64
    %v621 = vpop.permute.xlu0 %620
    %v623 = vmul.f32 %v616, %v621
    %625 = vrot.lane.b32.xlu0 %v623, 32
    %v626 = vpop.permute.xlu0 %625
    %v628 = vadd.f32 %v618, %v626
    %v629 = vtanh.pop %v628
    %631 = vrot.lane.b32.xlu0 %v629, 64
    %v632 = vpop.permute.xlu0 %631
    %v634 = vmul.f32 %v616, %v632
    %s635 = sadd.s32 %s49, 7
    %p636 = scmp.lt.s32.totalorder %s635, 1
    %s637 = scalar_select %p636, 1, 0
    %v638 = vstv %s637
    %vm639 = vcmp.eq.s32.totalorder %v638, 1
    %v640 = vsel %vm639, %v634, %v567
    %v641 = vsel %vm639, %v628, %v568
    %643 = vrot.lane.b32.xlu0 %v640, 32
    %v644 = vpop.permute.xlu0 %643
    %646 = vst.msk [vmem:[%s4 + $0x7] sm:$0x1] %vm134, %v644
    %647 = vst.msk [vmem:[#allocation2] sm:$0x1] %vm134, %v644
    %649 = vrot.lane.b32.xlu0 %v641, 96
    %v650 = vpop.permute.xlu0 %649
    %652 = vst.msk [vmem:[#allocation3] sm:$0x1] %vm134, %v650
    // Predicated region
    $region26: #{lstm_forward_pallas.1} parent=1 // pred_check
      %p653 = pneg %p36
    $region27: #{lstm_forward_pallas.1} parent=1 // pred_check_branch
      %655 = sbr.rel (%p653) target = $region29
    $region28: #{lstm_forward_pallas.1} parent=1 // pred_region
      %656 = vst.msk [vmem:[#allocation7] sm:$0x1] %vm134, %v644
      %657 = vst.msk [vmem:[#allocation7 + $0x1] sm:$0x1] %vm134, %v650
    $region29: #{lstm_forward_pallas.1} parent=1 // pred_fallthru
      _
    // Predicated region
    $region30: #{lstm_forward_pallas.1} parent=1 // pred_check
      _
    $region31: #{lstm_forward_pallas.1} parent=1 // pred_check_branch
      %659 = sbr.rel (0) target = $region33
    $region32: #{lstm_forward_pallas.1} parent=1 // pred_region
      _
    $region33: #{lstm_forward_pallas.1} parent=1 // pred_fallthru
      _
    // Predicated region
    $region34: #{lstm_forward_pallas.1} parent=1 // pred_check
      _
    $region35: #{lstm_forward_pallas.1} parent=1 // pred_check_branch
      %661 = sbr.rel (0) target = $region37
    $region36: #{lstm_forward_pallas.1} parent=1 // pred_region
      %663 = vsyncadd [#allocation6], 0
      %s665 = sshll.u32 [#allocation7], 4
      %s666 = int_to_ptr.vmem [resolvable:$true] %s665
      %s667 = sshll.u32 %s5, 4
      %s668 = int_to_ptr.hbm [resolvable:$true] %s667
      %670 = dma.vmem_to_hbm [thread:$0]  %s666, 32, %s668, [#allocation6]
    $region37: #{lstm_forward_pallas.1} parent=1 // pred_fallthru
      _
    // Predicated region
    $region38: #{lstm_forward_pallas.1} parent=1 // pred_check
      _
    $region39: #{lstm_forward_pallas.1} parent=1 // pred_check_branch
      %672 = sbr.rel (0) target = $region41
    $region40: #{lstm_forward_pallas.1} parent=1 // pred_region
      _
    $region41: #{lstm_forward_pallas.1} parent=1 // pred_fallthru
      _
    // Predicated region
    $region42: #{lstm_forward_pallas.1} parent=1 // pred_check
      _
    $region43: #{lstm_forward_pallas.1} parent=1 // pred_check_branch
      %674 = sbr.rel (0) target = $region45
    $region44: #{lstm_forward_pallas.1} parent=1 // pred_region
      %676 = dma.done [#allocation6], 32
    $region45: #{lstm_forward_pallas.1} parent=1 // pred_fallthru
      _
    %677 = vsyncpa [#allocation5], 1
    %678 = vsyncpa [#allocation6], 1

</llo_original>
